<compile_context>
chip_gen: v7x
topology: tpu7x:2x2x1
jax: 0.10.0
libtpu: 0.0.40
codegen_flags: <defaults>
</compile_context>

<pallas_src>
import numpy as np

import jax
import jax.numpy as jnp
from jax.experimental import pallas as pl
from jax.experimental.pallas import tpu as pltpu

N_IND = 5            # number of indicator groups
ROWS = 8             # sublane-padded element count  (max indicator length 6 <= 8)
LANES = 128          # lane-padded indicator count
IND_LENS = (5, 6, 4, 2, 5)
IND_FILLS = (-5.0, 5.0, -5.0, -5.0, -5.0)


def _lane_constants():
    """Per-lane constants built from iota (always lowers; hoisted out of loops)."""
    lane = jax.lax.broadcasted_iota(jnp.int32, (1, LANES), 1)        # (1, 128)
    sub = jax.lax.broadcasted_iota(jnp.int32, (ROWS, LANES), 0)      # (8, 128)
    inv_len = jnp.zeros((1, LANES), jnp.float32)
    n_elems = jnp.zeros((1, LANES), jnp.int32)
    for j, length in enumerate(IND_LENS):
        inv_len = jnp.where(lane == j, jnp.float32(1.0 / length), inv_len)
        n_elems = jnp.where(lane == j, jnp.int32(length), n_elems)
    elem_valid = sub < n_elems                 # (8, 128): real parameter slots
    lane_is_signal = lane < N_IND              # (1, 128): lanes 0..4
    lane_is_agg = lane == N_IND                # (1, 128): lane 5
    return elem_valid, inv_len, lane_is_signal, lane_is_agg


# --------------------------------------------------------------------------- #
# Kernels
# --------------------------------------------------------------------------- #
def indicator_tuner_kernel(params_ref, out_ref):
    """Single instance: (8, 128) params tile -> (1, 128) packed result row."""
    elem_valid, inv_len, lane_is_signal, lane_is_agg = _lane_constants()
    p = jnp.where(elem_valid, params_ref[...], 0.0)                  # guard padding
    mean = jnp.sum(p, axis=0, keepdims=True) * inv_len               # (1, 128)
    sig = jnp.where(lane_is_signal, jax.nn.sigmoid(mean), 0.0)       # (1, 128)
    agg = jnp.sum(sig) * jnp.float32(1.0 / N_IND)                    # scalar
    out_ref[...] = jnp.where(lane_is_agg, agg, sig)                  # lane-dense store


def indicator_tuner_batched_kernel(params_ref, out_ref):
    """Batched: (TB, 8, 128) params block -> (TB, 128) packed result rows."""
    elem_valid, inv_len, lane_is_signal, lane_is_agg = _lane_constants()
    p = jnp.where(elem_valid[None], params_ref[...], 0.0)            # (TB, 8, 128)
    mean = jnp.sum(p, axis=1) * inv_len                              # (TB, 128)
    sig = jnp.where(lane_is_signal, jax.nn.sigmoid(mean), 0.0)       # (TB, 128)
    agg = jnp.sum(sig, axis=1, keepdims=True) * jnp.float32(1.0 / N_IND)  # (TB, 1)
    out_ref[...] = jnp.where(lane_is_agg, agg, sig)                  # (TB, 128)


# --------------------------------------------------------------------------- #
# Wrappers
# --------------------------------------------------------------------------- #
def indicator_tuner_forward(params_packed):
    """Single-instance Pallas path (launch-overhead bound; see header NOTE)."""
    out_row = pl.pallas_call(
        indicator_tuner_kernel,
        out_shape=jax.ShapeDtypeStruct((1, LANES), jnp.float32),
        in_specs=[pl.BlockSpec((ROWS, LANES), lambda: (0, 0))],
        out_specs=pl.BlockSpec((1, LANES), lambda: (0, 0)),
    )(params_packed)
    signals = out_row[0, :N_IND]        # (5,)
    aggregator = out_row[0, N_IND]      # scalar
    return signals, aggregator


def indicator_tuner_forward_batched(params_packed, *, tb=512):
    """Batched Pallas path: params_packed is (B, 8, 128) -> ((B, 5), (B,))."""
    b = params_packed.shape[0]
    tb = int(min(tb, b))
    if b >= 8:
        tb = max(8, (tb // 8) * 8)          # out block sublane dim must be 8-aligned
    b_pad = pl.cdiv(b, tb) * tb
    if b_pad != b:
        params_packed = jnp.pad(params_packed, ((0, b_pad - b), (0, 0), (0, 0)))

    blk_in_bytes = tb * ROWS * LANES * 4
    blk_out_bytes = tb * LANES * 4
    # 2 pipeline buffers x (in + out) blocks, plus headroom for scratch/constants.
    vmem_limit = 2 * (blk_in_bytes + blk_out_bytes) + (4 << 20)

    out = pl.pallas_call(
        indicator_tuner_batched_kernel,
        out_shape=jax.ShapeDtypeStruct((b_pad, LANES), jnp.float32),
        grid=(b_pad // tb,),
        in_specs=[pl.BlockSpec((tb, ROWS, LANES), lambda i: (i, 0, 0))],
        out_specs=pl.BlockSpec((tb, LANES), lambda i: (i, 0)),
        compiler_params=pltpu.CompilerParams(
            dimension_semantics=("parallel",),
            vmem_limit_bytes=int(vmem_limit)),
    )(params_packed)

    signals = out[:b, :N_IND]           # (B, 5)
    aggregator = out[:b, N_IND]         # (B,)
    return signals, aggregator


# --------------------------------------------------------------------------- #
# Parameter packing + plain-JAX reference
# --------------------------------------------------------------------------- #
def build_params():
    """Column-wise packing exactly matching IndicatorTuner.__init__ values."""
    p = np.zeros((ROWS, LANES), np.float32)
    for j, (length, fill) in enumerate(zip(IND_LENS, IND_FILLS)):
        p[:length, j] = fill
    return jnp.asarray(p)


def reference_forward(params_packed):
    """Plain-JAX forward on packed params (works single or batched).

    This is also the recommended path when only ONE instance runs per step:
    XLA fuses it with neighboring ops and avoids the custom-call launch cost.
    """
    sigs = []
    for j, length in enumerate(IND_LENS):
        vec = params_packed[..., :length, j]
        sigs.append(jax.nn.sigmoid(jnp.mean(vec, axis=-1)))
    signals = jnp.stack(sigs, axis=-1)
    return signals, jnp.mean(signals, axis=-1)


if __name__ == "__main__":
    key = jax.random.PRNGKey(0)

    # ---- single instance: exact PyTorch module parameters -------------------
    params = build_params()
    signals, aggregator = indicator_tuner_forward(params)
    jax.block_until_ready((signals, aggregator))

    ref_signals, ref_agg = reference_forward(params)
    assert signals.shape == (N_IND,)
    assert aggregator.shape == ()
    assert jnp.allclose(signals, ref_signals, atol=1e-6)
    assert jnp.allclose(aggregator, ref_agg, atol=1e-6)

    # ---- batched production path (small B here; TB scales to 512+ in prod) --
    B = 8
    noise = 0.1 * jax.random.normal(key, (B, ROWS, LANES), dtype=jnp.float32)
    batch = params[None] + noise        # dirty padding on purpose: kernel masks it
    b_signals, b_agg = indicator_tuner_forward_batched(batch, tb=8)
    jax.block_until_ready((b_signals, b_agg))

    ref_b_signals, ref_b_agg = reference_forward(batch)
    assert b_signals.shape == (B, N_IND)
    assert b_agg.shape == (B,)
    assert jnp.allclose(b_signals, ref_b_signals, atol=1e-6)
    assert jnp.allclose(b_agg, ref_b_agg, atol=1e-6)

    print("KERNEL_OK")
</pallas_src>

<mosaic_0001>
module attributes {stable_mosaic.version = 11 : i64} {
  func.func @indicator_tuner_kernel(%arg0: memref<8x128xf32, #tpu.memory_space<vmem>>, %arg1: memref<1x128xf32, #tpu.memory_space<vmem>>) attributes {dimension_semantics = [], scalar_prefetch = 0 : i64, scratch_operands = 0 : i64, tpu.core_type = #tpu.core_type<tc>} {
    %0 = tpu.iota {dimensions = array<i32: 1>} : vector<1x128xi32>
    %1 = tpu.iota {dimensions = array<i32: 0>} : vector<8x128xi32>
    %cst = arith.constant 0.000000e+00 : f32
    %2 = vector.broadcast %cst : f32 to vector<1x128xf32>
    %c0_i32 = arith.constant 0 : i32
    %3 = vector.broadcast %c0_i32 : i32 to vector<1x128xi32>
    %c0_i32_0 = arith.constant 0 : i32
    %4 = vector.broadcast %c0_i32_0 : i32 to vector<1x128xi32>
    %5 = arith.cmpi eq, %0, %4 : vector<1x128xi32>
    %cst_1 = arith.constant 2.000000e-01 : f32
    %6 = vector.broadcast %cst_1 : f32 to vector<1x128xf32>
    %7 = arith.select %5, %6, %2 : vector<1x128xi1>, vector<1x128xf32>
    %c0_i32_2 = arith.constant 0 : i32
    %8 = vector.broadcast %c0_i32_2 : i32 to vector<1x128xi32>
    %9 = arith.cmpi eq, %0, %8 : vector<1x128xi32>
    %c5_i32 = arith.constant 5 : i32
    %10 = vector.broadcast %c5_i32 : i32 to vector<1x128xi32>
    %11 = arith.select %9, %10, %3 : vector<1x128xi1>, vector<1x128xi32>
    %c1_i32 = arith.constant 1 : i32
    %12 = vector.broadcast %c1_i32 : i32 to vector<1x128xi32>
    %13 = arith.cmpi eq, %0, %12 : vector<1x128xi32>
    %cst_3 = arith.constant 0.166666672 : f32
    %14 = vector.broadcast %cst_3 : f32 to vector<1x128xf32>
    %15 = arith.select %13, %14, %7 : vector<1x128xi1>, vector<1x128xf32>
    %c1_i32_4 = arith.constant 1 : i32
    %16 = vector.broadcast %c1_i32_4 : i32 to vector<1x128xi32>
    %17 = arith.cmpi eq, %0, %16 : vector<1x128xi32>
    %c6_i32 = arith.constant 6 : i32
    %18 = vector.broadcast %c6_i32 : i32 to vector<1x128xi32>
    %19 = arith.select %17, %18, %11 : vector<1x128xi1>, vector<1x128xi32>
    %c2_i32 = arith.constant 2 : i32
    %20 = vector.broadcast %c2_i32 : i32 to vector<1x128xi32>
    %21 = arith.cmpi eq, %0, %20 : vector<1x128xi32>
    %cst_5 = arith.constant 2.500000e-01 : f32
    %22 = vector.broadcast %cst_5 : f32 to vector<1x128xf32>
    %23 = arith.select %21, %22, %15 : vector<1x128xi1>, vector<1x128xf32>
    %c2_i32_6 = arith.constant 2 : i32
    %24 = vector.broadcast %c2_i32_6 : i32 to vector<1x128xi32>
    %25 = arith.cmpi eq, %0, %24 : vector<1x128xi32>
    %c4_i32 = arith.constant 4 : i32
    %26 = vector.broadcast %c4_i32 : i32 to vector<1x128xi32>
    %27 = arith.select %25, %26, %19 : vector<1x128xi1>, vector<1x128xi32>
    %c3_i32 = arith.constant 3 : i32
    %28 = vector.broadcast %c3_i32 : i32 to vector<1x128xi32>
    %29 = arith.cmpi eq, %0, %28 : vector<1x128xi32>
    %cst_7 = arith.constant 5.000000e-01 : f32
    %30 = vector.broadcast %cst_7 : f32 to vector<1x128xf32>
    %31 = arith.select %29, %30, %23 : vector<1x128xi1>, vector<1x128xf32>
    %c3_i32_8 = arith.constant 3 : i32
    %32 = vector.broadcast %c3_i32_8 : i32 to vector<1x128xi32>
    %33 = arith.cmpi eq, %0, %32 : vector<1x128xi32>
    %c2_i32_9 = arith.constant 2 : i32
    %34 = vector.broadcast %c2_i32_9 : i32 to vector<1x128xi32>
    %35 = arith.select %33, %34, %27 : vector<1x128xi1>, vector<1x128xi32>
    %c4_i32_10 = arith.constant 4 : i32
    %36 = vector.broadcast %c4_i32_10 : i32 to vector<1x128xi32>
    %37 = arith.cmpi eq, %0, %36 : vector<1x128xi32>
    %cst_11 = arith.constant 2.000000e-01 : f32
    %38 = vector.broadcast %cst_11 : f32 to vector<1x128xf32>
    %39 = arith.select %37, %38, %31 : vector<1x128xi1>, vector<1x128xf32>
    %c4_i32_12 = arith.constant 4 : i32
    %40 = vector.broadcast %c4_i32_12 : i32 to vector<1x128xi32>
    %41 = arith.cmpi eq, %0, %40 : vector<1x128xi32>
    %c5_i32_13 = arith.constant 5 : i32
    %42 = vector.broadcast %c5_i32_13 : i32 to vector<1x128xi32>
    %43 = arith.select %41, %42, %35 : vector<1x128xi1>, vector<1x128xi32>
    %44 = vector.broadcast %43 : vector<1x128xi32> to vector<8x128xi32>
    %45 = arith.cmpi slt, %1, %44 : vector<8x128xi32>
    %c5_i32_14 = arith.constant 5 : i32
    %46 = vector.broadcast %c5_i32_14 : i32 to vector<1x128xi32>
    %47 = arith.cmpi slt, %0, %46 : vector<1x128xi32>
    %c5_i32_15 = arith.constant 5 : i32
    %48 = vector.broadcast %c5_i32_15 : i32 to vector<1x128xi32>
    %49 = arith.cmpi eq, %0, %48 : vector<1x128xi32>
    %c0 = arith.constant 0 : index
    %c0_16 = arith.constant 0 : index
    %50 = vector.load %arg0[%c0, %c0_16] : memref<8x128xf32, #tpu.memory_space<vmem>>, vector<8x128xf32>
    %cst_17 = arith.constant 0.000000e+00 : f32
    %51 = vector.broadcast %cst_17 : f32 to vector<8x128xf32>
    %52 = arith.select %45, %50, %51 : vector<8x128xi1>, vector<8x128xf32>
    %cst_18 = arith.constant dense<0.000000e+00> : vector<128xf32>
    %53 = vector.multi_reduction <add>, %52, %cst_18 [0] : vector<8x128xf32> to vector<128xf32>
    %54 = vector.shape_cast %53 : vector<128xf32> to vector<1x128xf32>
    %55 = arith.mulf %54, %39 : vector<1x128xf32>
    %56 = arith.negf %55 : vector<1x128xf32>
    %57 = math.exp %56 : vector<1x128xf32>
    %cst_19 = arith.constant 1.000000e+00 : f32
    %58 = vector.broadcast %cst_19 : f32 to vector<1x128xf32>
    %59 = arith.addf %58, %57 : vector<1x128xf32>
    %60 = arith.divf %58, %59 : vector<1x128xf32>
    %cst_20 = arith.constant 0.000000e+00 : f32
    %61 = vector.broadcast %cst_20 : f32 to vector<1x128xf32>
    %62 = arith.select %47, %60, %61 : vector<1x128xi1>, vector<1x128xf32>
    %63 = vector.shape_cast %62 : vector<1x128xf32> to vector<1x1x128xf32>
    %cst_21 = arith.constant dense<0.000000e+00> : vector<1xf32>
    %64 = vector.multi_reduction <add>, %63, %cst_21 [1, 2] : vector<1x1x128xf32> to vector<1xf32>
    %65 = vector.shape_cast %64 : vector<1xf32> to vector<1x1x1xf32>
    %66 = vector.extract %65[0, 0, 0] : f32 from vector<1x1x1xf32>
    %cst_22 = arith.constant 2.000000e-01 : f32
    %67 = arith.mulf %66, %cst_22 : f32
    %68 = vector.broadcast %67 : f32 to vector<1x128xf32>
    %69 = arith.select %49, %68, %62 : vector<1x128xi1>, vector<1x128xf32>
    %c0_23 = arith.constant 0 : index
    %c0_24 = arith.constant 0 : index
    %70 = vector.load %arg1[%c0_23, %c0_24] : memref<1x128xf32, #tpu.memory_space<vmem>>, vector<1x128xf32>
    tpu.vector_store %arg1[%c0_23, %c0_24], %69 {strides = array<i32>} : memref<1x128xf32, #tpu.memory_space<vmem>>, vector<1x128xf32>,
    return
  }
}

</mosaic_0001>

<llo_original>
// kernel: tpu_custom_call.1
$region0: #{tpu_custom_call.1}
  #allocation0 [shape = 'u32[]', space=smem, size = 0x4, offset = 0x4, fixed_abs, tag = 'smem constant byte address 0x4 - core index']
  #allocation1 [shape = 'u32[144,128]{1,0:T(1,128)}', space=vmem, size = 0x12000, scoped, tag = 'internal scratch']
  %s0 = inlined_call_operand.hbm [shape: f32[8,128], index: 0, kind: input, shape index: {}]
  %s1 = inlined_call_operand.hbm [shape: f32[1,128], index: 1, kind: output, shape index: {}]
  %s2 = sld [smem:[#allocation0]]
  $region18: #{tpu_custom_call.1} parent=0
    _
  %s4 = ssub.s32 1, %s2
  %s5 = scalar_select 0, %s4, %s2
  $region1: #{tpu_custom_call.1} parent=0
    #allocation2 [shape = 'u8[4096]{0}', space=vmem, size = 0x1000, scoped, tag = 'input window, operand 0, single buffered']
    #allocation3 [shape = 's32[1]{0}', space=sflag, size = 0x4, scoped, tag = 'scoped memory for tpu_custom_call.1']
    #allocation4 [shape = 's32[1]{0}', space=sflag, size = 0x4, scoped, tag = 'scoped memory for tpu_custom_call.1']
    #allocation5 [shape = 'u8[512]{0}', space=vmem, size = 0x400, scoped, tag = 'output window, operand 0, single buffered']
    %6 = vsyncpa [#allocation3], 0
    %7 = vsyncpa [#allocation4], 0
    // Predicated region
    $region2: #{tpu_custom_call.1} parent=1 // pred_check
      _
    $region3: #{tpu_custom_call.1} parent=1 // pred_check_branch
      %9 = sbr.rel (0) target = $region5
    $region4: #{tpu_custom_call.1} parent=1 // pred_region
      %s11 = ssub.s32 128, 128
      %12 = vsyncadd [#allocation3], %s11
      %s14 = sshll.u32 [#allocation2], 4
      %s15 = int_to_ptr.vmem [resolvable:$true] %s14
      %17 = dma.hbm_to_vmem [thread:$0]  %s0, 128, %s15, [#allocation3]
    $region5: #{tpu_custom_call.1} parent=1 // pred_fallthru
      _
    // Predicated region
    $region6: #{tpu_custom_call.1} parent=1 // pred_check
      _
    $region7: #{tpu_custom_call.1} parent=1 // pred_check_branch
      %19 = sbr.rel (0) target = $region9
    $region8: #{tpu_custom_call.1} parent=1 // pred_region
      %20 = dma.done [#allocation3], 128
    $region9: #{tpu_custom_call.1} parent=1 // pred_fallthru
      _
    %v21 = vlaneseq
    %v22 = vand.u32 %v21, 127
    %v23 = vlaneseq
    %v24 = vshrl.u32 %v23, 7
    %vm25 = vcmp.eq.s32.totalorder %v22, 0
    %v26 = vsel %vm25, 0.2, 0.0
    %v27 = vsel %vm25, 5, 0
    %vm28 = vcmp.eq.s32.totalorder %v22, 1
    %v29 = vsel %vm28, 0.16666667, %v26
    %v30 = vsel %vm28, 6, %v27
    %vm31 = vcmp.eq.s32.totalorder %v22, 2
    %v32 = vsel %vm31, 0.25, %v29
    %v33 = vsel %vm31, 4, %v30
    %vm34 = vcmp.eq.s32.totalorder %v22, 3
    %v35 = vsel %vm34, 0.5, %v32
    %v36 = vsel %vm34, 2, %v33
    %vm37 = vcmp.eq.s32.totalorder %v22, 4
    %v38 = vsel %vm37, 0.2, %v35
    %v39 = vsel %vm37, 5, %v36
    %vm40 = vcmp.lt.s32.totalorder %v24, %v39
    %vm41 = vcmp.lt.s32.totalorder %v22, 5
    %vm42 = vcmp.eq.s32.totalorder %v22, 5
    %v43 = vld [vmem:[#allocation2] sm:$0xff]
    %v44 = vsel %vm40, %v43, 0.0
    %v45 = vrot.slane %v44, 4
    %v46 = vadd.f32 %v44, %v45
    %v47 = vrot.slane %v46, 2
    %v48 = vadd.f32 %v46, %v47
    %v49 = vrot.slane %v48, 1
    %v50 = vadd.f32 %v48, %v49
    %v51 = vmul.f32 %v50, %v38
    %v52 = vxor.u32 %v51, 2147483648
    %v53 = vmul.f32 %v52, 1.442695
    %v54 = vpow.pop %v53
    %v55 = vadd.f32 %v54, 1.0
    %v56 = vrcp.pop %v55
    %v57 = vmul.f32 1.0, %v56
    %v58 = vsel %vm41, %v57, 0.0
    %vm59 = vcmask 1040384
    %v60 = vsel %vm59, %v58, 0.0
    %61 = vadd.xlane.f32.xlu0 %v60
    %v62 = vpop.xlane.xlu0 %61
    %v63 = vrot.slane %v62, 4
    %v64 = vadd.f32 %v62, %v63
    %v65 = vrot.slane %v64, 2
    %v66 = vadd.f32 %v64, %v65
    %v67 = vrot.slane %v66, 1
    %v68 = vadd.f32 %v66, %v67
    %s69 = vtos %v68
    %s70 = smul.f32 %s69, 0.2
    %v71 = vstv %s70
    %v72 = vsel %vm42, %v71, %v58
    %73 = vst [vmem:[#allocation5] sm:$0x1] %v72
    // Predicated region
    $region10: #{tpu_custom_call.1} parent=1 // pred_check
      _
    $region11: #{tpu_custom_call.1} parent=1 // pred_check_branch
      %75 = sbr.rel (0) target = $region13
    $region12: #{tpu_custom_call.1} parent=1 // pred_region
      %s77 = ssub.s32 16, 16
      %78 = vsyncadd [#allocation4], %s77
      %s80 = sshll.u32 [#allocation5], 4
      %s81 = int_to_ptr.vmem [resolvable:$true] %s80
      %83 = dma.vmem_to_hbm [thread:$0]  %s81, 16, %s1, [#allocation4]
    $region13: #{tpu_custom_call.1} parent=1 // pred_fallthru
      _
    // Predicated region
    $region14: #{tpu_custom_call.1} parent=1 // pred_check
      _
    $region15: #{tpu_custom_call.1} parent=1 // pred_check_branch
      %85 = sbr.rel (0) target = $region17
    $region16: #{tpu_custom_call.1} parent=1 // pred_region
      %86 = dma.done [#allocation4], 16
    $region17: #{tpu_custom_call.1} parent=1 // pred_fallthru
      _
    %87 = vsyncpa [#allocation3], 1
    %88 = vsyncpa [#allocation4], 1

</llo_original>
